<compile_context>
chip_gen: v5e
topology: v5e:2x2
jax: 0.10.0
libtpu: 0.0.40
codegen_flags: <defaults>
</compile_context>

<pallas_src>
import functools

import jax
import jax.numpy as jnp
from jax import lax
from jax.experimental import pallas as pl
from jax.experimental.pallas import tpu as pltpu

EPS = 1e-5


def _resnet_block_kernel(x_ref, wa_ref, w2_ref, pp_ref, o_ref, *, pre, nb, cout):
    wa = wa_ref[...]                       # (2*Cout, Cin) if pre else (Cout, Cin)
    w2 = w2_ref[...]                       # (Cout, Cout)
    pp = pp_ref[...]                       # (Cout, 8) packed per-channel params (f32)
    s1, t1 = pp[:, 0:1], pp[:, 1:2]
    s2, t2 = pp[:, 2:3], pp[:, 3:4]
    br = pp[:, 4:5]

    p = x_ref.shape[-1]
    inv_p = 1.0 / p

    def folded_norm(h, s, t):
        # Single-pass moments + folded InstanceNorm*BN affine.
        sm = jnp.sum(h, axis=1, keepdims=True)
        ssq = jnp.sum(h * h, axis=1, keepdims=True)
        mu = sm * inv_p
        var = jnp.maximum(ssq * inv_p - mu * mu, 0.0)
        alpha = s * lax.rsqrt(var + EPS)
        beta = t - mu * alpha
        return alpha, beta

    def body(b, carry):
        xb = x_ref[b]                                              # (Cin, P), io dtype

        # conv1 (fused with residual projection when pre) -> f32 accum.
        y = jnp.dot(wa, xb, preferred_element_type=jnp.float32)
        if pre:
            h = y[:cout]                                           # (Cout, P)
            x1 = y[cout:] + br                                     # (Cout, P)
        else:
            h = y
            x1 = xb.astype(jnp.float32)                            # Cin == Cout

        # InstanceNorm -> BN(eval, folded) -> ReLU   (one FMA + one max pass)
        a1, b1 = folded_norm(h, s1, t1)
        h = jnp.maximum(h * a1 + b1, 0.0)

        # conv2 -> InstanceNorm -> BN(eval, folded)
        h = jnp.dot(w2, h.astype(w2.dtype), preferred_element_type=jnp.float32)
        a2, b2 = folded_norm(h, s2, t2)
        h = h * a2 + b2

        o_ref[b] = jnp.maximum(h + x1, 0.0).astype(o_ref.dtype)
        return carry

    if nb == 1:
        body(0, 0)
    else:
        lax.fori_loop(0, nb, body, 0, unroll=True)


def _pick_batch_tile(n, cin, cout, p, io_bytes, *, pre, max_nb=8):
    """Pick samples-per-grid-step and a VMEM limit, generation-aware."""
    try:
        info = pltpu.get_tpu_info()
        vmem_cap = int(getattr(info, "vmem_capacity_bytes", 0) or 0)
    except Exception:
        vmem_cap = 0
    if vmem_cap <= 0:
        vmem_cap = 64 << 20  # conservative (v7x-class) fallback

    vmem_limit = int(min(96 << 20, (vmem_cap * 3) // 4))      # 96MiB on 128MiB parts, 48MiB on 64MiB
    block_budget = int(min(44 << 20, vmem_cap // 3))          # budget for double-buffered I/O blocks

    # Double-buffered HBM<->VMEM blocks per sample (input + output).
    per_sample_blocks = (cin + cout) * p * io_bytes * 2
    # In-kernel f32 intermediates for ONE live sample (fori_loop bounds liveness).
    m_rows = 2 * cout if pre else cout
    intermediates = (m_rows + 2 * cout + cin) * p * 4
    budget = max(block_budget - intermediates, per_sample_blocks)

    min_steps = min(4, n)   # keep enough grid steps for pipelining / megacore
    nb = 1
    for cand in range(1, min(n, max_nb) + 1):
        if n % cand != 0:
            continue
        if cand * per_sample_blocks > budget:
            continue
        if n // cand < min_steps:
            continue
        nb = cand
    return nb, vmem_limit


def resnet_block_pallas(x_nchw, params, *, pre, io_dtype=jnp.float32):
    """x_nchw: (N, Cin, H, W).  Returns (N, Cout, H, W) in io_dtype."""
    N, Cin, H, W = x_nchw.shape
    P = H * W
    Cout = params["w1"].shape[0]
    if not pre:
        assert Cin == Cout, "pre=False identity residual requires Cin == Cout"

    io_bytes = jnp.dtype(io_dtype).itemsize

    # NCHW -> (N, Cin, P): contiguous reshape, no transpose.
    x = x_nchw.reshape(N, Cin, P).astype(io_dtype)

    # Fold eval BatchNorm into per-channel scale/shift.  Conv biases b1/b2 are
    # dropped (cancelled by the InstanceNorm mean).  Pack per-channel vectors
    # into one (Cout, 8) f32 array (channels on sublanes).
    s1 = params["bn1_g"] / jnp.sqrt(params["bn1_rv"] + EPS)
    t1 = params["bn1_b"] - params["bn1_rm"] * s1
    s2 = params["bn2_g"] / jnp.sqrt(params["bn2_rv"] + EPS)
    t2 = params["bn2_b"] - params["bn2_rm"] * s2
    br = params["br"] if pre else jnp.zeros((Cout,), jnp.float32)
    z = jnp.zeros((Cout,), jnp.float32)
    pp = jnp.stack([s1, t1, s2, t2, br, z, z, z], axis=1).astype(jnp.float32)

    # Fuse conv1 and the residual projection weights when pre=True.
    if pre:
        wa = jnp.concatenate([params["w1"], params["wr"]], axis=0).astype(io_dtype)
    else:
        wa = params["w1"].astype(io_dtype)
    w2 = params["w2"].astype(io_dtype)

    nb, vmem_limit = _pick_batch_tile(N, Cin, Cout, P, io_bytes, pre=pre)
    grid = (N // nb,)

    def full_spec(a):
        nd = a.ndim
        return pl.BlockSpec(a.shape, lambda n, _nd=nd: (0,) * _nd)

    in_specs = [
        pl.BlockSpec((nb, Cin, P), lambda n: (n, 0, 0)),
        full_spec(wa),
        full_spec(w2),
        full_spec(pp),
    ]

    flops = 2 * N * P * (Cout * Cin * (2 if pre else 1) + Cout * Cout)
    weight_bytes = wa.size * io_bytes + w2.size * io_bytes + pp.size * 4
    bytes_accessed = (Cin + Cout) * N * P * io_bytes + weight_bytes
    cost = pl.CostEstimate(flops=int(flops),
                           transcendentals=int(2 * N * Cout),
                           bytes_accessed=int(bytes_accessed))

    out = pl.pallas_call(
        functools.partial(_resnet_block_kernel, pre=pre, nb=nb, cout=Cout),
        out_shape=jax.ShapeDtypeStruct((N, Cout, P), io_dtype),
        grid_spec=pltpu.PrefetchScalarGridSpec(
            num_scalar_prefetch=0,
            grid=grid,
            in_specs=in_specs,
            out_specs=pl.BlockSpec((nb, Cout, P), lambda n: (n, 0, 0)),
        ),
        compiler_params=pltpu.CompilerParams(
            dimension_semantics=("parallel",),
            vmem_limit_bytes=vmem_limit,
        ),
        cost_estimate=cost,
    )(x, wa, w2, pp)

    # (N, Cout, P) -> NCHW: contiguous reshape, no transpose.
    return out.reshape(N, Cout, H, W)


# ---------------- pure-JAX reference (for correctness check) ----------------
def _ref_forward(x, p, *, pre):
    def conv1x1(x, w, b):
        return jnp.einsum("nchw,oc->nohw", x, w) + b[None, :, None, None]

    def inorm(x):
        mu = x.mean(axis=(2, 3), keepdims=True)
        var = ((x - mu) ** 2).mean(axis=(2, 3), keepdims=True)
        return (x - mu) / jnp.sqrt(var + EPS)

    def bnorm(x, g, b, rm, rv):
        return ((x - rm[None, :, None, None]) / jnp.sqrt(rv + EPS)[None, :, None, None]
                ) * g[None, :, None, None] + b[None, :, None, None]

    x1 = conv1x1(x, p["wr"], p["br"]) if pre else x
    h = conv1x1(x, p["w1"], p["b1"])
    h = bnorm(inorm(h), p["bn1_g"], p["bn1_b"], p["bn1_rm"], p["bn1_rv"])
    h = jnp.maximum(h, 0.0)
    h = conv1x1(h, p["w2"], p["b2"])
    h = bnorm(inorm(h), p["bn2_g"], p["bn2_b"], p["bn2_rm"], p["bn2_rv"])
    return jnp.maximum(h + x1, 0.0)


def _init_params(key, cin, cout):
    ks = jax.random.split(key, 12)
    u = lambda k, shape, lo, hi: jax.random.uniform(k, shape, jnp.float32, lo, hi)
    return {
        "w1": u(ks[0], (cout, cin), -0.5, 0.5),
        "b1": u(ks[1], (cout,), -0.1, 0.1),
        "w2": u(ks[2], (cout, cout), -0.5, 0.5),
        "b2": u(ks[3], (cout,), -0.1, 0.1),
        "wr": u(ks[4], (cout, cin), -0.5, 0.5),
        "br": u(ks[5], (cout,), -0.1, 0.1),
        "bn1_g": u(ks[6], (cout,), 0.5, 1.5),
        "bn1_b": u(ks[7], (cout,), -0.2, 0.2),
        "bn1_rm": u(ks[8], (cout,), -0.2, 0.2),
        "bn1_rv": u(ks[9], (cout,), 0.5, 1.5),
        "bn2_g": u(ks[10], (cout,), 0.5, 1.5),
        "bn2_b": u(ks[11], (cout,), -0.2, 0.2),
        "bn2_rm": u(ks[8], (cout,), -0.1, 0.1),
        "bn2_rv": u(ks[9], (cout,), 0.8, 1.2),
    }


if __name__ == "__main__":
    key = jax.random.PRNGKey(0)
    kx, kp = jax.random.split(key)

    N, Cin, Cout, H, W = 2, 4, 8, 16, 16

    # pre=True: right-branch 1x1 projection (Cin != Cout), f32.
    x = jax.random.normal(kx, (N, Cin, H, W), jnp.float32)
    params = _init_params(kp, Cin, Cout)
    out = jax.block_until_ready(resnet_block_pallas(x, params, pre=True))
    ref = _ref_forward(x, params, pre=True)
    assert out.shape == (N, Cout, H, W)
    assert jnp.allclose(out, ref, rtol=2e-4, atol=2e-4), "mismatch (pre=True, f32)"

    # pre=False: identity residual (Cin == Cout), f32.
    x2 = jax.random.normal(kx, (N, Cout, H, W), jnp.float32)
    params2 = _init_params(kp, Cout, Cout)
    out2 = jax.block_until_ready(resnet_block_pallas(x2, params2, pre=False))
    ref2 = _ref_forward(x2, params2, pre=False)
    assert jnp.allclose(out2, ref2, rtol=2e-4, atol=2e-4), "mismatch (pre=False, f32)"

    # Larger batch: exercises nb > 1 (fori_loop path, multiple samples per step).
    N8 = 8
    x3 = jax.random.normal(kx, (N8, Cin, H, W), jnp.float32)
    out3 = jax.block_until_ready(resnet_block_pallas(x3, params, pre=True))
    ref3 = _ref_forward(x3, params, pre=True)
    assert jnp.allclose(out3, ref3, rtol=2e-4, atol=2e-4), "mismatch (nb>1, f32)"

    # bf16 I/O + bf16 MXU operands (memory-bound optimization path); loose tol.
    out4 = jax.block_until_ready(
        resnet_block_pallas(x, params, pre=True, io_dtype=jnp.bfloat16))
    assert jnp.allclose(out4.astype(jnp.float32), ref, rtol=2e-1, atol=2e-1), \
        "mismatch (pre=True, bf16)"

    print("KERNEL_OK")
</pallas_src>

<mosaic_0001>
module attributes {stable_mosaic.version = 11 : i64} {
  func.func @_resnet_block_kernel(%arg0: i32, %arg1: memref<1x4x256xf32, #tpu.memory_space<vmem>>, %arg2: memref<16x4xf32, #tpu.memory_space<vmem>>, %arg3: memref<8x8xf32, #tpu.memory_space<vmem>>, %arg4: memref<8x8xf32, #tpu.memory_space<vmem>>, %arg5: memref<1x8x256xf32, #tpu.memory_space<vmem>>) attributes {dimension_semantics = [#tpu.dimension_semantics<parallel>], iteration_bounds = array<i64: 2>, scalar_prefetch = 0 : i64, scratch_operands = 0 : i64, tpu.core_type = #tpu.core_type<tc>, window_params = [{transform_indices = @transform_0, window_bounds = array<i64: 1, 4, 256>}, {pipeline_mode = #tpu.pipeline_mode<synchronous>, transform_indices = @transform_1, window_bounds = array<i64: 16, 4>}, {pipeline_mode = #tpu.pipeline_mode<synchronous>, transform_indices = @transform_2, window_bounds = array<i64: 8, 8>}, {pipeline_mode = #tpu.pipeline_mode<synchronous>, transform_indices = @transform_3, window_bounds = array<i64: 8, 8>}, {transform_indices = @transform_4, window_bounds = array<i64: 1, 8, 256>}]} {
    %c0 = arith.constant 0 : index
    %c0_0 = arith.constant 0 : index
    %0 = vector.load %arg2[%c0, %c0_0] : memref<16x4xf32, #tpu.memory_space<vmem>>, vector<16x4xf32>
    %c0_1 = arith.constant 0 : index
    %c0_2 = arith.constant 0 : index
    %1 = vector.load %arg3[%c0_1, %c0_2] : memref<8x8xf32, #tpu.memory_space<vmem>>, vector<8x8xf32>
    %c0_3 = arith.constant 0 : index
    %c0_4 = arith.constant 0 : index
    %2 = vector.load %arg4[%c0_3, %c0_4] : memref<8x8xf32, #tpu.memory_space<vmem>>, vector<8x8xf32>
    %3 = vector.extract_strided_slice %2 {offsets = [0, 0], sizes = [8, 1], strides = [1, 1]} : vector<8x8xf32> to vector<8x1xf32>
    %4 = vector.extract_strided_slice %2 {offsets = [0, 1], sizes = [8, 1], strides = [1, 1]} : vector<8x8xf32> to vector<8x1xf32>
    %5 = vector.extract_strided_slice %2 {offsets = [0, 2], sizes = [8, 1], strides = [1, 1]} : vector<8x8xf32> to vector<8x1xf32>
    %6 = vector.extract_strided_slice %2 {offsets = [0, 3], sizes = [8, 1], strides = [1, 1]} : vector<8x8xf32> to vector<8x1xf32>
    %7 = vector.extract_strided_slice %2 {offsets = [0, 4], sizes = [8, 1], strides = [1, 1]} : vector<8x8xf32> to vector<8x1xf32>
    %c0_5 = arith.constant 0 : index
    %c0_6 = arith.constant 0 : index
    %c0_7 = arith.constant 0 : index
    %8 = vector.load %arg1[%c0_5, %c0_6, %c0_7] : memref<1x4x256xf32, #tpu.memory_space<vmem>>, vector<1x4x256xf32>
    %9 = vector.shape_cast %8 : vector<1x4x256xf32> to vector<4x256xf32>
    %cst = arith.constant dense<0.000000e+00> : vector<16x256xf32>
    %10 = tpu.matmul %0, %9, %cst {dimension_numbers = #tpu.dot_dimension_numbers<[1], [0], [0], [1], [0, 0, 1, 1], [], []>} : vector<16x4xf32>, vector<4x256xf32>, vector<16x256xf32> -> vector<16x256xf32>
    %11 = vector.extract_strided_slice %10 {offsets = [0, 0], sizes = [8, 256], strides = [1, 1]} : vector<16x256xf32> to vector<8x256xf32>
    %12 = vector.extract_strided_slice %10 {offsets = [8, 0], sizes = [8, 256], strides = [1, 1]} : vector<16x256xf32> to vector<8x256xf32>
    %13 = vector.broadcast %7 : vector<8x1xf32> to vector<8x256xf32>
    %14 = arith.addf %12, %13 : vector<8x256xf32>
    %cst_8 = arith.constant dense<0.000000e+00> : vector<8xf32>
    %15 = vector.multi_reduction <add>, %11, %cst_8 [1] : vector<8x256xf32> to vector<8xf32>
    %16 = vector.shape_cast %15 : vector<8xf32> to vector<8x1xf32>
    %17 = arith.mulf %11, %11 : vector<8x256xf32>
    %cst_9 = arith.constant dense<0.000000e+00> : vector<8xf32>
    %18 = vector.multi_reduction <add>, %17, %cst_9 [1] : vector<8x256xf32> to vector<8xf32>
    %19 = vector.shape_cast %18 : vector<8xf32> to vector<8x1xf32>
    %cst_10 = arith.constant 3.906250e-03 : f32
    %20 = vector.broadcast %cst_10 : f32 to vector<8x1xf32>
    %21 = arith.mulf %16, %20 : vector<8x1xf32>
    %cst_11 = arith.constant 3.906250e-03 : f32
    %22 = vector.broadcast %cst_11 : f32 to vector<8x1xf32>
    %23 = arith.mulf %19, %22 : vector<8x1xf32>
    %24 = arith.mulf %21, %21 : vector<8x1xf32>
    %25 = arith.subf %23, %24 : vector<8x1xf32>
    %cst_12 = arith.constant 0.000000e+00 : f32
    %26 = vector.broadcast %cst_12 : f32 to vector<8x1xf32>
    %27 = arith.maximumf %25, %26 : vector<8x1xf32>
    %cst_13 = arith.constant 9.99999974E-6 : f32
    %28 = vector.broadcast %cst_13 : f32 to vector<8x1xf32>
    %29 = arith.addf %27, %28 : vector<8x1xf32>
    %30 = math.rsqrt %29 : vector<8x1xf32>
    %31 = arith.mulf %3, %30 : vector<8x1xf32>
    %32 = arith.mulf %21, %31 : vector<8x1xf32>
    %33 = arith.subf %4, %32 : vector<8x1xf32>
    %34 = vector.broadcast %31 : vector<8x1xf32> to vector<8x256xf32>
    %35 = arith.mulf %11, %34 : vector<8x256xf32>
    %36 = vector.broadcast %33 : vector<8x1xf32> to vector<8x256xf32>
    %37 = arith.addf %35, %36 : vector<8x256xf32>
    %cst_14 = arith.constant 0.000000e+00 : f32
    %38 = vector.broadcast %cst_14 : f32 to vector<8x256xf32>
    %39 = arith.maximumf %37, %38 : vector<8x256xf32>
    %cst_15 = arith.constant dense<0.000000e+00> : vector<8x256xf32>
    %40 = tpu.matmul %1, %39, %cst_15 {dimension_numbers = #tpu.dot_dimension_numbers<[1], [0], [0], [1], [0, 0, 1, 1], [], []>} : vector<8x8xf32>, vector<8x256xf32>, vector<8x256xf32> -> vector<8x256xf32>
    %cst_16 = arith.constant dense<0.000000e+00> : vector<8xf32>
    %41 = vector.multi_reduction <add>, %40, %cst_16 [1] : vector<8x256xf32> to vector<8xf32>
    %42 = vector.shape_cast %41 : vector<8xf32> to vector<8x1xf32>
    %43 = arith.mulf %40, %40 : vector<8x256xf32>
    %cst_17 = arith.constant dense<0.000000e+00> : vector<8xf32>
    %44 = vector.multi_reduction <add>, %43, %cst_17 [1] : vector<8x256xf32> to vector<8xf32>
    %45 = vector.shape_cast %44 : vector<8xf32> to vector<8x1xf32>
    %cst_18 = arith.constant 3.906250e-03 : f32
    %46 = vector.broadcast %cst_18 : f32 to vector<8x1xf32>
    %47 = arith.mulf %42, %46 : vector<8x1xf32>
    %cst_19 = arith.constant 3.906250e-03 : f32
    %48 = vector.broadcast %cst_19 : f32 to vector<8x1xf32>
    %49 = arith.mulf %45, %48 : vector<8x1xf32>
    %50 = arith.mulf %47, %47 : vector<8x1xf32>
    %51 = arith.subf %49, %50 : vector<8x1xf32>
    %cst_20 = arith.constant 0.000000e+00 : f32
    %52 = vector.broadcast %cst_20 : f32 to vector<8x1xf32>
    %53 = arith.maximumf %51, %52 : vector<8x1xf32>
    %cst_21 = arith.constant 9.99999974E-6 : f32
    %54 = vector.broadcast %cst_21 : f32 to vector<8x1xf32>
    %55 = arith.addf %53, %54 : vector<8x1xf32>
    %56 = math.rsqrt %55 : vector<8x1xf32>
    %57 = arith.mulf %5, %56 : vector<8x1xf32>
    %58 = arith.mulf %47, %57 : vector<8x1xf32>
    %59 = arith.subf %6, %58 : vector<8x1xf32>
    %60 = vector.broadcast %57 : vector<8x1xf32> to vector<8x256xf32>
    %61 = arith.mulf %40, %60 : vector<8x256xf32>
    %62 = vector.broadcast %59 : vector<8x1xf32> to vector<8x256xf32>
    %63 = arith.addf %61, %62 : vector<8x256xf32>
    %64 = arith.addf %63, %14 : vector<8x256xf32>
    %cst_22 = arith.constant 0.000000e+00 : f32
    %65 = vector.broadcast %cst_22 : f32 to vector<8x256xf32>
    %66 = arith.maximumf %64, %65 : vector<8x256xf32>
    %c0_23 = arith.constant 0 : index
    %c0_24 = arith.constant 0 : index
    %c0_25 = arith.constant 0 : index
    %67 = vector.load %arg5[%c0_23, %c0_24, %c0_25] : memref<1x8x256xf32, #tpu.memory_space<vmem>>, vector<1x8x256xf32>
    %68 = vector.shape_cast %67 : vector<1x8x256xf32> to vector<8x256xf32>
    %69 = vector.shape_cast %66 : vector<8x256xf32> to vector<1x8x256xf32>
    tpu.vector_store %arg5[%c0_23, %c0_24, %c0_25], %69 {strides = array<i32>} : memref<1x8x256xf32, #tpu.memory_space<vmem>>, vector<1x8x256xf32>,
    return
  }
  func.func @transform_0(%arg0: i32) -> (i32, i32, i32) {
    %c0_i32 = arith.constant 0 : i32
    %c0_i32_0 = arith.constant 0 : i32
    %c0_i32_1 = arith.constant 0 : i32
    return %arg0, %c0_i32, %c0_i32_0 : i32, i32, i32
  }
  func.func @transform_1(%arg0: i32) -> (i32, i32) {
    %c0_i32 = arith.constant 0 : i32
    %c0_i32_0 = arith.constant 0 : i32
    %c0_i32_1 = arith.constant 0 : i32
    return %c0_i32, %c0_i32_0 : i32, i32
  }
  func.func @transform_2(%arg0: i32) -> (i32, i32) {
    %c0_i32 = arith.constant 0 : i32
    %c0_i32_0 = arith.constant 0 : i32
    %c0_i32_1 = arith.constant 0 : i32
    return %c0_i32, %c0_i32_0 : i32, i32
  }
  func.func @transform_3(%arg0: i32) -> (i32, i32) {
    %c0_i32 = arith.constant 0 : i32
    %c0_i32_0 = arith.constant 0 : i32
    %c0_i32_1 = arith.constant 0 : i32
    return %c0_i32, %c0_i32_0 : i32, i32
  }
  func.func @transform_4(%arg0: i32) -> (i32, i32, i32) {
    %c0_i32 = arith.constant 0 : i32
    %c0_i32_0 = arith.constant 0 : i32
    %c0_i32_1 = arith.constant 0 : i32
    return %arg0, %c0_i32, %c0_i32_0 : i32, i32, i32
  }
}

</mosaic_0001>

<llo_original>
// kernel: tpu_custom_call.1
$region0: #{tpu_custom_call.1}
  #allocation0 [shape = 'u32[]', space=smem, size = 0x4, offset = 0x4, fixed_abs, tag = 'smem constant byte address 0x4 - core index']
  #allocation1 [shape = 'u32[72,128]{1,0:T(1,128)}', space=vmem, size = 0x9000, scoped, tag = 'internal scratch']
  %s0 = inlined_call_operand.vmem [shape: f32[2,4,256], index: 0, kind: input, shape index: {}]
  %s1 = inlined_call_operand.vmem [shape: f32[16,4], index: 1, kind: input, shape index: {}]
  %s2 = inlined_call_operand.hbm [shape: f32[8,8], index: 2, kind: input, shape index: {}]
  %s3 = inlined_call_operand.hbm [shape: f32[8,8], index: 3, kind: input, shape index: {}]
  %s4 = inlined_call_operand.hbm [shape: f32[2,8,256], index: 4, kind: output, shape index: {}]
  %s5 = sld [smem:[#allocation0]]
  $region57: #{tpu_custom_call.1} parent=0
    _
  %s7 = ssub.s32 1, %s5
  %s8 = scalar_select 0, %s7, %s5
  $region1: #{tpu_custom_call.1} parent=0
    #allocation2 [shape = 'u8[4096]{0}', space=vmem, size = 0x1000, scoped, tag = 'input window, operand 2, single buffered']
    #allocation3 [shape = 's32[2]{0}', space=sflag, size = 0x8, scoped, tag = 'scoped memory for tpu_custom_call.1']
    #allocation4 [shape = 's32[2]{0}', space=sflag, size = 0x8, scoped, tag = 'scoped memory for tpu_custom_call.1']
    #allocation5 [shape = 'u8[4096]{0}', space=vmem, size = 0x1000, scoped, tag = 'input window, operand 3, single buffered']
    #allocation6 [shape = 's32[1]{0}', space=sflag, size = 0x4, scoped, tag = 'scoped memory for tpu_custom_call.1']
    #allocation7 [shape = 'u8[16384]{0}', space=vmem, size = 0x4000, scoped, tag = 'output window, operand 0']
    %9 = vsyncpa [#allocation3], 0
    %10 = vsyncpa [#allocation6], 0
    %11 = vsyncpa [#allocation4], 0
    %s12 = scalar_lea.sflag [#allocation4], 1
    %13 = vsyncpa %s12, 0
    loop: start=0, step=1, limit=4
    $region2: #{tpu_custom_call.1} parent=1 // loop_pre_header
      _
    $region3: #{tpu_custom_call.1} parent=1 // loop_header
      %s15 = sphi 0, %s19
      %p16 = scmp.ge.s32.totalorder %s15, 4
      %s25 = sphi 0, %s27
      %s28 = sphi 0, %s25
      %s29 = sphi 0, %s28
      %s45 = sphi 0, %s29
      %s49 = sphi 0, %s49
      %s51 = sphi 0, %s49
      %s52 = sphi 0, %s51
      %s66 = sphi 0, %s52
      %s70 = sphi 0, %s70
      %s72 = sphi 0, %s70
      %s73 = sphi 0, %s72
      %s87 = sphi 0, %s73
      %s91 = sphi 0, %s91
      %s93 = sphi 0, %s91
      %s94 = sphi 0, %s93
      %s108 = sphi 0, %s94
      %s114 = sphi 0, %s116
      %s117 = sphi 0, %s114
      %s118 = sphi 0, %s117
      %s134 = sphi 0, %s118
    $region4: #{tpu_custom_call.1} parent=1 // loop_header_branch
      %18 = sbr.rel (%p16) target = $region8
    $region5: #{tpu_custom_call.1} parent=1 // loop_body
      %s20 = ssub.s32 %s15, 1
      %s21 = ssub.s32 %s15, 2
      %s22 = sadd.s32 %s15, 1
      %s23 = ssub.s32 %s15, %s22
      %p24 = scmp.eq.s32.totalorder %s23, 0
      %s26 = sadd.s32 %s25, 1
      %s27 = scalar_select %p24, %s25, %s26
      %p30 = pneg %p24
      %p31 = scmp.eq.s32.totalorder %s15, 1
      %p32 = por %p30, %p31
      %p33 = scmp.ne.s32.totalorder %s25, %s28
      %p34 = scmp.eq.s32.totalorder %s15, 0
      %p35 = por %p33, %p34
      %p36 = scmp.ne.s32.totalorder %s25, %s28
      %p37 = scmp.eq.s32.totalorder %s20, 1
      %p38 = por %p36, %p37
      %p39 = scmp.ne.s32.totalorder %s28, %s29
      %p40 = scmp.eq.s32.totalorder %s20, 0
      %p41 = por %p39, %p40
      %p42 = scmp.ne.s32.totalorder %s28, %s29
      %p43 = scmp.eq.s32.totalorder %s21, 1
      %p44 = por %p42, %p43
      %p46 = scmp.ne.s32.totalorder %s29, %s45
      %p47 = scmp.eq.s32.totalorder %s21, 0
      %p48 = por %p46, %p47
      %s50 = sadd.s32 %s49, 1
      %p53 = scmp.eq.s32.totalorder %s15, 1
      %p54 = scmp.ne.s32.totalorder %s49, %s51
      %p55 = scmp.eq.s32.totalorder %s15, 0
      %p56 = por %p54, %p55
      %p57 = scmp.ne.s32.totalorder %s49, %s51
      %p58 = scmp.eq.s32.totalorder %s20, 1
      %p59 = por %p57, %p58
      %p60 = scmp.ne.s32.totalorder %s51, %s52
      %p61 = scmp.eq.s32.totalorder %s20, 0
      %p62 = por %p60, %p61
      %p63 = scmp.ne.s32.totalorder %s51, %s52
      %p64 = scmp.eq.s32.totalorder %s21, 1
      %p65 = por %p63, %p64
      %p67 = scmp.ne.s32.totalorder %s52, %s66
      %p68 = scmp.eq.s32.totalorder %s21, 0
      %p69 = por %p67, %p68
      %s71 = sadd.s32 %s70, 1
      %p74 = scmp.eq.s32.totalorder %s15, 1
      %p75 = scmp.ne.s32.totalorder %s70, %s72
      %p76 = scmp.eq.s32.totalorder %s15, 0
      %p77 = por %p75, %p76
      %p78 = scmp.ne.s32.totalorder %s70, %s72
      %p79 = scmp.eq.s32.totalorder %s20, 1
      %p80 = por %p78, %p79
      %p81 = scmp.ne.s32.totalorder %s72, %s73
      %p82 = scmp.eq.s32.totalorder %s20, 0
      %p83 = por %p81, %p82
      %p84 = scmp.ne.s32.totalorder %s72, %s73
      %p85 = scmp.eq.s32.totalorder %s21, 1
      %p86 = por %p84, %p85
      %p88 = scmp.ne.s32.totalorder %s73, %s87
      %p89 = scmp.eq.s32.totalorder %s21, 0
      %p90 = por %p88, %p89
      %s92 = sadd.s32 %s91, 1
      %p95 = scmp.eq.s32.totalorder %s15, 1
      %p96 = scmp.ne.s32.totalorder %s91, %s93
      %p97 = scmp.eq.s32.totalorder %s15, 0
      %p98 = por %p96, %p97
      %p99 = scmp.ne.s32.totalorder %s91, %s93
      %p100 = scmp.eq.s32.totalorder %s20, 1
      %p101 = por %p99, %p100
      %p102 = scmp.ne.s32.totalorder %s93, %s94
      %p103 = scmp.eq.s32.totalorder %s20, 0
      %p104 = por %p102, %p103
      %p105 = scmp.ne.s32.totalorder %s93, %s94
      %p106 = scmp.eq.s32.totalorder %s21, 1
      %p107 = por %p105, %p106
      %p109 = scmp.ne.s32.totalorder %s94, %s108
      %p110 = scmp.eq.s32.totalorder %s21, 0
      %p111 = por %p109, %p110
      %s112 = ssub.s32 %s15, %s22
      %p113 = scmp.eq.s32.totalorder %s112, 0
      %s115 = sadd.s32 %s114, 1
      %s116 = scalar_select %p113, %s114, %s115
      %p119 = pneg %p113
      %p120 = scmp.eq.s32.totalorder %s15, 1
      %p121 = por %p119, %p120
      %p122 = scmp.ne.s32.totalorder %s114, %s117
      %p123 = scmp.eq.s32.totalorder %s15, 0
      %p124 = por %p122, %p123
      %p125 = scmp.ne.s32.totalorder %s114, %s117
      %p126 = scmp.eq.s32.totalorder %s20, 1
      %p127 = por %p125, %p126
      %p128 = scmp.ne.s32.totalorder %s117, %s118
      %p129 = scmp.eq.s32.totalorder %s20, 0
      %p130 = por %p128, %p129
      %p131 = scmp.ne.s32.totalorder %s117, %s118
      %p132 = scmp.eq.s32.totalorder %s21, 1
      %p133 = por %p131, %p132
      %p135 = scmp.ne.s32.totalorder %s118, %s134
      %p136 = scmp.eq.s32.totalorder %s21, 0
      %p137 = por %p135, %p136
      %p138 = scmp.le.s32.totalorder 1, %s15
      %p139 = scmp.lt.s32.totalorder %s15, 3
      %p140 = pnand %p138, %p139
      %p141 = pneg %p140
      // Predicated region
      $region9: #{tpu_custom_call.1} parent=5 // pred_check
        _
      $region10: #{tpu_custom_call.1} parent=5 // pred_check_branch
        %143 = sbr.rel (%p140) target = $region12
      $region11: #{tpu_custom_call.1} parent=5 // pred_region
        %s144 = ssub.s32 %s15, 1
        // Predicated region
        $region13: #{tpu_custom_call.1} parent=11 // pred_check
          %p145 = pneg %p62
        $region14: #{tpu_custom_call.1} parent=11 // pred_check_branch
          %147 = sbr.rel (%p145) target = $region16
        $region15: #{tpu_custom_call.1} parent=11 // pred_region
          _
        $region16: #{tpu_custom_call.1} parent=11 // pred_fallthru
          _
        // Predicated region
        $region17: #{tpu_custom_call.1} parent=11 // pred_check
          %p148 = pneg %p83
        $region18: #{tpu_custom_call.1} parent=11 // pred_check_branch
          %150 = sbr.rel (%p148) target = $region20
        $region19: #{tpu_custom_call.1} parent=11 // pred_region
          %152 = vsyncadd [#allocation3], 0
          %s154 = sshll.u32 %s2, 4
          %s155 = int_to_ptr.hbm [resolvable:$true] %s154
          %s156 = sshll.u32 [#allocation2], 4
          %s157 = int_to_ptr.vmem [resolvable:$true] %s156
          %159 = dma.hbm_to_vmem [thread:$0]  %s155, 128, %s157, [#allocation3]
        $region20: #{tpu_custom_call.1} parent=11 // pred_fallthru
          _
        // Predicated region
        $region21: #{tpu_custom_call.1} parent=11 // pred_check
          %p160 = pneg %p104
        $region22: #{tpu_custom_call.1} parent=11 // pred_check_branch
          %162 = sbr.rel (%p160) target = $region24
        $region23: #{tpu_custom_call.1} parent=11 // pred_region
          %164 = vsyncadd [#allocation6], 0
          %s166 = sshll.u32 %s3, 4
          %s167 = int_to_ptr.hbm [resolvable:$true] %s166
          %s168 = sshll.u32 [#allocation5], 4
          %s169 = int_to_ptr.vmem [resolvable:$true] %s168
          %171 = dma.hbm_to_vmem [thread:$0]  %s167, 128, %s169, [#allocation6]
        $region24: #{tpu_custom_call.1} parent=11 // pred_fallthru
          _
      $region12: #{tpu_custom_call.1} parent=5 // pred_fallthru
        _
      %p172 = scmp.lt.s32.totalorder %s15, 2
      // Predicated region
      $region25: #{tpu_custom_call.1} parent=5 // pred_check
        %p173 = pneg %p172
      $region26: #{tpu_custom_call.1} parent=5 // pred_check_branch
        %175 = sbr.rel (%p173) target = $region28
      $region27: #{tpu_custom_call.1} parent=5 // pred_region
        // Predicated region
        $region29: #{tpu_custom_call.1} parent=27 // pred_check
          %p176 = pneg %p35
        $region30: #{tpu_custom_call.1} parent=27 // pred_check_branch
          %178 = sbr.rel (%p176) target = $region32
        $region31: #{tpu_custom_call.1} parent=27 // pred_region
          %p179 = scmp.lt.s32.totalorder %s15, 1
          %s180 = scalar_select %p179, %s15, 1
          %s181 = smul.addr %s180, 2
          %s182 = smul.addr %s181, 4
          %s183 = scalar_lea.vmem %s0, %s182
        $region32: #{tpu_custom_call.1} parent=27 // pred_fallthru
          _
      $region28: #{tpu_custom_call.1} parent=5 // pred_fallthru
        _
      %p184 = scmp.le.s32.totalorder 1, %s15
      %p185 = scmp.lt.s32.totalorder %s15, 3
      %p186 = pnand %p184, %p185
      %p187 = pneg %p186
      // Predicated region
      $region33: #{tpu_custom_call.1} parent=5 // pred_check
        _
      $region34: #{tpu_custom_call.1} parent=5 // pred_check_branch
        %189 = sbr.rel (%p186) target = $region36
      $region35: #{tpu_custom_call.1} parent=5 // pred_region
        %s190 = ssub.s32 %s15, 1
        // Predicated region
        $region37: #{tpu_custom_call.1} parent=35 // pred_check
          %p191 = pneg %p83
        $region38: #{tpu_custom_call.1} parent=35 // pred_check_branch
          %193 = sbr.rel (%p191) target = $region40
        $region39: #{tpu_custom_call.1} parent=35 // pred_region
          %195 = dma.done [#allocation3], 128
        $region40: #{tpu_custom_call.1} parent=35 // pred_fallthru
          _
        // Predicated region
        $region41: #{tpu_custom_call.1} parent=35 // pred_check
          %p196 = pneg %p104
        $region42: #{tpu_custom_call.1} parent=35 // pred_check_branch
          %198 = sbr.rel (%p196) target = $region44
        $region43: #{tpu_custom_call.1} parent=35 // pred_region
          %200 = dma.done [#allocation6], 128
        $region44: #{tpu_custom_call.1} parent=35 // pred_fallthru
          _
        %p201 = scmp.lt.s32.totalorder %s20, 1
        %s202 = scalar_select %p201, %s20, 1
        %s203 = smul.addr %s202, 2
        %s204 = smul.addr %s203, 4
        %s205 = scalar_lea.vmem %s0, %s204
        %p206 = pneg %p41
        %p207 = pneg %p38
        %p208 = pneg %p62
        %p209 = pneg %p59
        %p210 = pneg %p83
        %p211 = pneg %p80
        %p212 = pneg %p104
        %p213 = pneg %p101
        %p214 = pneg %p130
        %p215 = pneg %p127
        %s216 = sand.u32 %s117, 1
        %s217 = scalar_lea.sflag [#allocation4], %s216
        %s218 = sand.u32 %s117, 1
        %s219 = smul.addr %s218, 16
        %s220 = scalar_lea.vmem [#allocation7], %s219
        %p221 = scmp.lt.s32.totalorder %s20, 1
        %s222 = scalar_select %p221, %s20, 1
        %s223 = smul.addr %s222, 2
        %s224 = smul.addr %s223, 4
        %s225 = scalar_lea.vmem %s0, %s224
        %v226 = vld [vmem:[%s1] sm:$0xff]
        %v227 = vld [vmem:[%s1 + $0x8] sm:$0xff]
        %v228 = vld [vmem:[#allocation2] sm:$0xff]
        %v229 = vld [vmem:[#allocation5] sm:$0xff]
        %v230 = vld [vmem:[%s225] sm:$0xff]
        %232 = vst [vmem:[#allocation1] ss:$2 sm:$0xff] %v230
        %v233 = vld.sshfl [vmem:[#allocation1] sm:$0xff pattern:$0x75316420]
        %v234 = vld.sshfl [vmem:[#allocation1 + $0x8] sm:$0xff pattern:$0x75316420]
        %vm235 = vcmask 31744
        %v237 = vsel %vm235, %v226, 0
        %v240 = vsel %vm235, %v227, 0
        %vm242 = vcmask 1043456
        %v243 = vsel %vm242, %v233, 0
        %v245 = vsel %vm242, %v234, 0
        %247 = vmatpush.msra.mxu0 0.0
        %248 = vmatpush.msra.mxu0 0.0
        %249 = vmatpush.msra.mxu0 0.0
        %250 = vmatpush.msra.mxu0 0.0
        %251 = vmatpush.msra.mxu0 0.0
        %252 = vmatpush.msra.mxu0 0.0
        %253 = vmatpush.msra.mxu0 0.0
        %254 = vmatpush.msra.mxu0 0.0
        %255 = vmatpush.msra.mxu0 0.0
        %256 = vmatpush.msra.mxu0 0.0
        %257 = vmatpush.msra.mxu0 0.0
        %258 = vmatpush.msra.mxu0 0.0
        %259 = vmatpush.msra.mxu0 0.0
        %260 = vmatpush.msra.mxu0 0.0
        %261 = vmatpush.msra.mxu0 0.0
        %262 = vmatpush.msra.mxu0 %v243
        %263 = vmatmul.f32.gmra.mxu0 %v237
        %v264 = vpop.f32.mrf.mxu0
        %v265 = vadd.f32 0.0, %v264
        %266 = vmatmul.f32.gmra.mxu0 %v240
        %v267 = vpop.f32.mrf.mxu0
        %v268 = vadd.f32 0.0, %v267
        %269 = vdwg.mxu0
        %270 = vmatpush.msra.mxu0 0.0
        %271 = vmatpush.msra.mxu0 0.0
        %272 = vmatpush.msra.mxu0 0.0
        %273 = vmatpush.msra.mxu0 0.0
        %274 = vmatpush.msra.mxu0 0.0
        %275 = vmatpush.msra.mxu0 0.0
        %276 = vmatpush.msra.mxu0 0.0
        %277 = vmatpush.msra.mxu0 0.0
        %278 = vmatpush.msra.mxu0 0.0
        %279 = vmatpush.msra.mxu0 0.0
        %280 = vmatpush.msra.mxu0 0.0
        %281 = vmatpush.msra.mxu0 0.0
        %282 = vmatpush.msra.mxu0 0.0
        %283 = vmatpush.msra.mxu0 0.0
        %284 = vmatpush.msra.mxu0 0.0
        %285 = vmatpush.msra.mxu0 %v245
        %286 = vmatmul.f32.gmra.mxu0 %v237
        %v287 = vpop.f32.mrf.mxu0
        %v288 = vadd.f32 0.0, %v287
        %289 = vmatmul.f32.gmra.mxu0 %v240
        %v290 = vpop.f32.mrf.mxu0
        %v291 = vadd.f32 0.0, %v290
        %292 = vdwg.mxu0
        %294 = vset.pattern.permute.xlu0 4
        %295 = vperm.xlu0 %294, %v229
        %v296 = vpop.permute.xlu0 %295
        %v298 = vadd.f32 %v268, %v296
        %v299 = vadd.f32 %v291, %v296
        %v300 = vadd.f32 %v265, %v288
        %301 = vadd.xlane.f32.xlu0 %v300
        %v302 = vpop.xlane.xlu0 %301
        %v303 = vmul.f32 %v265, %v265
        %v304 = vmul.f32 %v288, %v288
        %v305 = vadd.f32 %v303, %v304
        %306 = vadd.xlane.f32.xlu0 %v305
        %v307 = vpop.xlane.xlu0 %306
        %v308 = vmul.f32 %v302, 0.00390625
        %v309 = vmul.f32 %v307, 0.00390625
        %v310 = vmul.f32 %v308, %v308
        %v311 = vsub.f32 %v309, %v310
        %v312 = vmax.f32 %v311, 0.0
        %v313 = vadd.f32 %v312, 1e-05
        %v314 = vrsqrt.pop %v313
        %v315 = vmul.f32 %v314, %v313
        %v316 = vmul.f32 %v315, %v314
        %v317 = vmul.f32 0.5, %v316
        %v318 = vsub.f32 1.5, %v317
        %v319 = vmul.f32 %v314, %v318
        %vm320 = vweird.f32 %v313
        %vm321 = vweird.f32 %v314
        %vm322 = vmor %vm320, %vm321
        %v323 = vsel %vm322, %v314, %v319
        %v324 = vmul.f32 %v229, %v323
        %v325 = vmul.f32 %v308, %v324
        %327 = vrot.lane.b32.xlu0 %v325, 1
        %v328 = vpop.permute.xlu0 %327
        %v330 = vsub.f32 %v229, %v328
        %332 = vset.pattern.permute.xlu0 0
        %333 = vperm.xlu0 %332, %v324
        %v334 = vpop.permute.xlu0 %333
        %v336 = vmul.f32 %v265, %v334
        %v337 = vmul.f32 %v288, %v334
        %339 = vset.pattern.permute.xlu0 1
        %340 = vperm.xlu0 %339, %v330
        %v341 = vpop.permute.xlu0 %340
        %v343 = vadd.f32 %v336, %v341
        %v344 = vadd.f32 %v337, %v341
        %v345 = vmax.f32 %v343, 0.0
        %v346 = vmax.f32 %v344, 0.0
        %vm347 = vcmask 64512
        %v349 = vsel %vm347, %v228, 0
        %351 = vmatpush.msra.mxu0 0.0
        %352 = vmatpush.msra.mxu0 0.0
        %353 = vmatpush.msra.mxu0 0.0
        %354 = vmatpush.msra.mxu0 0.0
        %355 = vmatpush.msra.mxu0 0.0
        %356 = vmatpush.msra.mxu0 0.0
        %357 = vmatpush.msra.mxu0 0.0
        %358 = vmatpush.msra.mxu0 0.0
        %359 = vmatpush.msra.mxu0 0.0
        %360 = vmatpush.msra.mxu0 0.0
        %361 = vmatpush.msra.mxu0 0.0
        %362 = vmatpush.msra.mxu0 0.0
        %363 = vmatpush.msra.mxu0 0.0
        %364 = vmatpush.msra.mxu0 0.0
        %365 = vmatpush.msra.mxu0 0.0
        %366 = vmatpush.msra.mxu0 %v345
        %367 = vmatmul.f32.gmra.mxu0 %v349
        %v368 = vpop.f32.mrf.mxu0
        %v369 = vadd.f32 0.0, %v368
        %370 = vdwg.mxu0
        %371 = vmatpush.msra.mxu0 0.0
        %372 = vmatpush.msra.mxu0 0.0
        %373 = vmatpush.msra.mxu0 0.0
        %374 = vmatpush.msra.mxu0 0.0
        %375 = vmatpush.msra.mxu0 0.0
        %376 = vmatpush.msra.mxu0 0.0
        %377 = vmatpush.msra.mxu0 0.0
        %378 = vmatpush.msra.mxu0 0.0
        %379 = vmatpush.msra.mxu0 0.0
        %380 = vmatpush.msra.mxu0 0.0
        %381 = vmatpush.msra.mxu0 0.0
        %382 = vmatpush.msra.mxu0 0.0
        %383 = vmatpush.msra.mxu0 0.0
        %384 = vmatpush.msra.mxu0 0.0
        %385 = vmatpush.msra.mxu0 0.0
        %386 = vmatpush.msra.mxu0 %v346
        %387 = vmatmul.f32.gmra.mxu0 %v349
        %v388 = vpop.f32.mrf.mxu0
        %v389 = vadd.f32 0.0, %v388
        %390 = vdwg.mxu0
        %v391 = vadd.f32 %v369, %v389
        %392 = vadd.xlane.f32.xlu0 %v391
        %v393 = vpop.xlane.xlu0 %392
        %v394 = vmul.f32 %v369, %v369
        %v395 = vmul.f32 %v389, %v389
        %v396 = vadd.f32 %v394, %v395
        %397 = vadd.xlane.f32.xlu0 %v396
        %v398 = vpop.xlane.xlu0 %397
        %v399 = vmul.f32 %v393, 0.00390625
        %v400 = vmul.f32 %v398, 0.00390625
        %v401 = vmul.f32 %v399, %v399
        %v402 = vsub.f32 %v400, %v401
        %v403 = vmax.f32 %v402, 0.0
        %v404 = vadd.f32 %v403, 1e-05
        %v405 = vrsqrt.pop %v404
        %v406 = vmul.f32 %v405, %v404
        %v407 = vmul.f32 %v406, %v405
        %v408 = vmul.f32 0.5, %v407
        %v409 = vsub.f32 1.5, %v408
        %v410 = vmul.f32 %v405, %v409
        %vm411 = vweird.f32 %v404
        %vm412 = vweird.f32 %v405
        %vm413 = vmor %vm411, %vm412
        %v414 = vsel %vm413, %v405, %v410
        %v415 = vmul.f32 %v229, %v414
        %v416 = vmul.f32 %v399, %v415
        %418 = vrot.lane.b32.xlu0 %v416, 1
        %v419 = vpop.permute.xlu0 %418
        %v421 = vsub.f32 %v229, %v419
        %423 = vset.pattern.permute.xlu0 2
        %424 = vperm.xlu0 %423, %v415
        %v425 = vpop.permute.xlu0 %424
        %v427 = vmul.f32 %v369, %v425
        %v428 = vmul.f32 %v389, %v425
        %430 = vset.pattern.permute.xlu0 3
        %431 = vperm.xlu0 %430, %v421
        %v432 = vpop.permute.xlu0 %431
        %v434 = vadd.f32 %v427, %v432
        %v435 = vadd.f32 %v428, %v432
        %v436 = vadd.f32 %v434, %v298
        %v437 = vadd.f32 %v435, %v299
        %v438 = vmax.f32 %v436, 0.0
        %v439 = vmax.f32 %v437, 0.0
        %440 = vst [vmem:[%s220] sm:$0xff] %v438
        %441 = vst [vmem:[%s220 + $0x8] sm:$0xff] %v439
        %s442 = sand.u32 %s117, 1
        %s443 = scalar_lea.sflag [#allocation4], %s442
        %s444 = sand.u32 %s117, 1
        %s445 = smul.addr %s444, 16
        %s446 = scalar_lea.vmem [#allocation7], %s445
        // Predicated region
        $region45: #{tpu_custom_call.1} parent=35 // pred_check
          %p447 = pneg %p127
        $region46: #{tpu_custom_call.1} parent=35 // pred_check_branch
          %449 = sbr.rel (%p447) target = $region48
        $region47: #{tpu_custom_call.1} parent=35 // pred_region
          %451 = vsyncadd %s443, 0
          %s452 = smul.addr %s20, 2
          %s453 = smul.addr %s452, 8
          %s454 = scalar_lea.hbm %s4, %s453
          %s456 = sshll.u32 %s446, 4
          %s457 = int_to_ptr.vmem [resolvable:$true] %s456
          %s458 = sshll.u32 %s454, 4
          %s459 = int_to_ptr.hbm [resolvable:$true] %s458
          %461 = dma.vmem_to_hbm [thread:$0]  %s457, 256, %s459, %s443
        $region48: #{tpu_custom_call.1} parent=35 // pred_fallthru
          _
      $region36: #{tpu_custom_call.1} parent=5 // pred_fallthru
        _
      %p462 = scmp.le.s32.totalorder 2, %s15
      // Predicated region
      $region49: #{tpu_custom_call.1} parent=5 // pred_check
        %p463 = pneg %p462
      $region50: #{tpu_custom_call.1} parent=5 // pred_check_branch
        %465 = sbr.rel (%p463) target = $region52
      $region51: #{tpu_custom_call.1} parent=5 // pred_region
        %s466 = ssub.s32 %s15, 2
        // Predicated region
        $region53: #{tpu_custom_call.1} parent=51 // pred_check
          %p467 = pneg %p133
        $region54: #{tpu_custom_call.1} parent=51 // pred_check_branch
          %469 = sbr.rel (%p467) target = $region56
        $region55: #{tpu_custom_call.1} parent=51 // pred_region
          %s470 = sand.u32 %s118, 1
          %s471 = scalar_lea.sflag [#allocation4], %s470
          %s472 = sand.u32 %s118, 1
          %s473 = smul.addr %s472, 16
          %s474 = scalar_lea.vmem [#allocation7], %s473
          %476 = dma.done %s471, 256
        $region56: #{tpu_custom_call.1} parent=51 // pred_fallthru
          _
      $region52: #{tpu_custom_call.1} parent=5 // pred_fallthru
        _
    $region6: #{tpu_custom_call.1} parent=1 // loop_footer
      %s19 = sadd.s32 1, %s15
    $region7: #{tpu_custom_call.1} parent=1 // loop_footer_branch
      %14 = sbr.rel target = $region3
    $region8: #{tpu_custom_call.1} parent=1 // loop_exit
      _
    %477 = vsyncpa [#allocation3], 1
    %s478 = scalar_lea.sflag [#allocation3], 1
    %479 = vsyncpa %s478, 1
    %480 = vsyncpa [#allocation6], 1
    %481 = vsyncpa [#allocation4], 1
    %s482 = scalar_lea.sflag [#allocation4], 1
    %483 = vsyncpa %s482, 1

</llo_original>
